<compile_context>
chip_gen: v5e
topology: v5e:2x2
jax: 0.10.0
libtpu: 0.0.40
codegen_flags: <defaults>
</compile_context>

<pallas_src>
import functools

import jax
import jax.numpy as jnp
from jax.experimental import pallas as pl
from jax.experimental.pallas import tpu as pltpu


# ---------------------------------------------------------------------------
# Config (small, consistent with the module's __init__)
# ---------------------------------------------------------------------------
B         = 2    # batch
SEQ_LEN   = 8    # backcast size
PRED_LEN  = 8    # forecast size
ENC_IN    = 4    # channels (blocks shared across channels)
D_FF      = 32   # MLP layer width
E_LAYERS  = 2    # MLP depth per block
D_LAYERS  = 2    # number of N-BEATS blocks
THETA     = SEQ_LEN + PRED_LEN


def _align8(n):
    return (n + 7) // 8 * 8


def _block_offsets(seq_len, d_ff, e_layers, theta):
    """Row offsets (within one block's packed region) of each parameter.

    Every region is rounded up to a multiple of 8 rows so all in-kernel
    sublane slices are tile-aligned.
    """
    offs = {"wht": [], "bh": []}
    r = 0
    offs["w0t"] = r; r += _align8(d_ff)      # w0^T : (d_ff, seq_len)
    offs["b0"]  = r; r += _align8(d_ff)      # b0   : (d_ff, 1) column
    for _ in range(e_layers - 1):
        offs["wht"].append(r); r += _align8(d_ff)   # wh^T : (d_ff, d_ff)
        offs["bh"].append(r);  r += _align8(d_ff)   # bh   : (d_ff, 1)
    offs["wtt"] = r; r += _align8(theta)     # wt^T : (theta, d_ff)
    offs["bt"]  = r; r += _align8(theta)     # bt   : (theta, 1)
    offs["rows"] = r
    return offs


# ---------------------------------------------------------------------------
# Pallas kernel: full N-BEATS stack, all batches*channels in one invocation
# ---------------------------------------------------------------------------
def nbeats_kernel(x_ref, p_ref, out_ref, *, seq_len, pred_len, d_ff,
                  e_layers, d_layers):
    # x_ref:  (B, seq_len, enc_in)   native caller layout
    # p_ref:  (d_layers*rows_per_block, d_ff)  packed, pre-transposed params
    # out_ref:(B, pred_len, enc_in)  native caller layout
    theta = seq_len + pred_len
    offs = _block_offsets(seq_len, d_ff, e_layers, theta)
    rows_per_block = offs["rows"]

    bsz = x_ref.shape[0]
    enc_in = x_ref.shape[2]
    ncols = bsz * enc_in

    # Column orientation: one time series per *column*, columns ordered
    # (batch, channel).  x[i] is already (seq_len, enc_in), so a lane concat
    # builds resid^T with zero transposes and no channel padding.
    x = x_ref[...].astype(jnp.float32)                              # (B,S,C)
    resid_t = jnp.concatenate([x[i] for i in range(bsz)], axis=1)   # (S,B*C)
    fore_t = jnp.zeros((pred_len, ncols), jnp.float32)              # (P,B*C)

    for blk in range(d_layers):
        base = blk * rows_per_block

        # First MLP layer: seq_len -> d_ff (pre-transposed weight), ReLU.
        w0t = p_ref[pl.ds(base + offs["w0t"], d_ff), pl.ds(0, seq_len)]
        b0c = p_ref[pl.ds(base + offs["b0"], d_ff), pl.ds(0, 1)]
        h = jnp.dot(w0t, resid_t, preferred_element_type=jnp.float32)
        h = jnp.maximum(h + b0c, 0.0)                               # (d_ff,B*C)

        # Remaining MLP layers: d_ff -> d_ff, ReLU.
        for l in range(e_layers - 1):
            wht = p_ref[pl.ds(base + offs["wht"][l], d_ff), pl.ds(0, d_ff)]
            bhc = p_ref[pl.ds(base + offs["bh"][l], d_ff), pl.ds(0, 1)]
            h = jnp.dot(wht, h, preferred_element_type=jnp.float32)
            h = jnp.maximum(h + bhc, 0.0)

        wtt_row = base + offs["wtt"]
        bt_row = base + offs["bt"]
        if blk == d_layers - 1:
            # Last block: residual update is dead code -> project only onto
            # the forecast rows of the basis (sublane offset seq_len is
            # 8-aligned).
            wtt_f = p_ref[pl.ds(wtt_row + seq_len, pred_len), pl.ds(0, d_ff)]
            bt_f = p_ref[pl.ds(bt_row + seq_len, pred_len), pl.ds(0, 1)]
            fore_t = fore_t + jnp.dot(
                wtt_f, h, preferred_element_type=jnp.float32) + bt_f
        else:
            wtt = p_ref[pl.ds(wtt_row, theta), pl.ds(0, d_ff)]
            btc = p_ref[pl.ds(bt_row, theta), pl.ds(0, 1)]
            th = jnp.dot(wtt, h, preferred_element_type=jnp.float32) + btc
            # GenericBasis split: plain 8-aligned sublane slices.
            resid_t = resid_t - th[:seq_len, :]
            fore_t = fore_t + th[seq_len:, :]

    # (pred_len, B*C) -> caller layout (B, pred_len, enc_in): per-batch lane
    # slab, transpose-free.
    for i in range(bsz):
        out_ref[i] = fore_t[:, i * enc_in:(i + 1) * enc_in].astype(out_ref.dtype)


# ---------------------------------------------------------------------------
# One-time parameter packing (outside the hot forward path)
# ---------------------------------------------------------------------------
def pack_params(params, *, seq_len=SEQ_LEN, pred_len=PRED_LEN, d_ff=D_FF,
                e_layers=E_LAYERS, d_layers=D_LAYERS):
    """Pre-transpose and pack all block parameters into one f32 buffer."""
    w0, b0, wh, bh, wt, bt = params
    theta = seq_len + pred_len
    offs = _block_offsets(seq_len, d_ff, e_layers, theta)
    rows_per_block = offs["rows"]
    buf = jnp.zeros((d_layers * rows_per_block, d_ff), jnp.float32)
    for blk in range(d_layers):
        base = blk * rows_per_block
        r = base + offs["w0t"]
        buf = buf.at[r:r + d_ff, :seq_len].set(w0[blk].T)
        r = base + offs["b0"]
        buf = buf.at[r:r + d_ff, :1].set(b0[blk].reshape(d_ff, 1))
        for l in range(e_layers - 1):
            r = base + offs["wht"][l]
            buf = buf.at[r:r + d_ff, :d_ff].set(wh[blk, l].T)
            r = base + offs["bh"][l]
            buf = buf.at[r:r + d_ff, :1].set(bh[blk, l].reshape(d_ff, 1))
        r = base + offs["wtt"]
        buf = buf.at[r:r + theta, :d_ff].set(wt[blk].T)
        r = base + offs["bt"]
        buf = buf.at[r:r + theta, :1].set(bt[blk].reshape(theta, 1))
    return buf


# ---------------------------------------------------------------------------
# Wrapper: single grid-less call, 2 operands, everything VMEM-resident
# ---------------------------------------------------------------------------
def nbeats_forward(x_enc, packed):
    """x_enc: (B, seq_len, enc_in) -> forecast: (B, pred_len, enc_in)."""
    bsz, seq_len, enc_in = x_enc.shape
    kern = functools.partial(
        nbeats_kernel, seq_len=seq_len, pred_len=PRED_LEN, d_ff=D_FF,
        e_layers=E_LAYERS, d_layers=D_LAYERS)
    vmem = pl.BlockSpec(memory_space=pltpu.MemorySpace.VMEM)
    return pl.pallas_call(
        kern,
        out_shape=jax.ShapeDtypeStruct((bsz, PRED_LEN, enc_in), jnp.float32),
        in_specs=[vmem, vmem],
        out_specs=vmem,
    )(x_enc, packed)


# ---------------------------------------------------------------------------
# Pure-JAX reference (mirrors the PyTorch forward exactly, original params)
# ---------------------------------------------------------------------------
def nbeats_reference(x_enc, params):
    w0, b0, wh, bh, wt, bt = params
    res = []
    for c in range(x_enc.shape[-1]):
        resid = x_enc[:, :, c]
        forecast = None
        for blk in range(D_LAYERS):
            h = jnp.maximum(resid @ w0[blk] + b0[blk, 0], 0.0)
            for l in range(E_LAYERS - 1):
                h = jnp.maximum(h @ wh[blk, l] + bh[blk, l, 0], 0.0)
            theta = h @ wt[blk] + bt[blk, 0]
            backcast, fcast = theta[:, :SEQ_LEN], theta[:, -PRED_LEN:]
            resid = resid - backcast
            forecast = fcast if forecast is None else forecast + fcast
        res.append(forecast)
    return jnp.stack(res, axis=-1)


# ---------------------------------------------------------------------------
# Deterministic parameter init (shapes follow NBeatsBlock.__init__)
# ---------------------------------------------------------------------------
def init_params(key):
    ks = jax.random.split(key, 6)
    scale = 0.1
    w0 = scale * jax.random.normal(ks[0], (D_LAYERS, SEQ_LEN, D_FF), jnp.float32)
    b0 = scale * jax.random.normal(ks[1], (D_LAYERS, 1, D_FF), jnp.float32)
    wh = scale * jax.random.normal(ks[2], (D_LAYERS, E_LAYERS - 1, D_FF, D_FF), jnp.float32)
    bh = scale * jax.random.normal(ks[3], (D_LAYERS, E_LAYERS - 1, 1, D_FF), jnp.float32)
    wt = scale * jax.random.normal(ks[4], (D_LAYERS, D_FF, THETA), jnp.float32)
    bt = scale * jax.random.normal(ks[5], (D_LAYERS, 1, THETA), jnp.float32)
    return (w0, b0, wh, bh, wt, bt)


if __name__ == "__main__":
    key = jax.random.PRNGKey(0)
    k_x, k_p = jax.random.split(key)

    # NBeats.forward(x) only consumes x (the blocks come from __init__).
    x_enc = jax.random.normal(k_x, (B, SEQ_LEN, ENC_IN), jnp.float32)
    params = init_params(k_p)

    # One-time packing (pre-transpose + pad) outside the hot forward path.
    packed = jax.block_until_ready(pack_params(params))

    out = jax.jit(nbeats_forward)(x_enc, packed)
    out = jax.block_until_ready(out)

    ref = nbeats_reference(x_enc, params)
    assert out.shape == (B, PRED_LEN, ENC_IN), out.shape
    assert jnp.allclose(out, ref, atol=5e-4, rtol=5e-4), \
        float(jnp.max(jnp.abs(out - ref)))

    print("KERNEL_OK")
</pallas_src>

<mosaic_0001>
module attributes {stable_mosaic.version = 11 : i64} {
  func.func @nbeats_kernel(%arg0: memref<2x8x4xf32, #tpu.memory_space<vmem>>, %arg1: memref<320x32xf32, #tpu.memory_space<vmem>>, %arg2: memref<2x8x4xf32, #tpu.memory_space<vmem>>) attributes {dimension_semantics = [], scalar_prefetch = 0 : i64, scratch_operands = 0 : i64, tpu.core_type = #tpu.core_type<tc>} {
    %c0 = arith.constant 0 : index
    %c0_0 = arith.constant 0 : index
    %c0_1 = arith.constant 0 : index
    %0 = vector.load %arg0[%c0, %c0_0, %c0_1] : memref<2x8x4xf32, #tpu.memory_space<vmem>>, vector<2x8x4xf32>
    %1 = vector.extract_strided_slice %0 {offsets = [0, 0, 0], sizes = [1, 8, 4], strides = [1, 1, 1]} : vector<2x8x4xf32> to vector<1x8x4xf32>
    %2 = vector.shape_cast %1 : vector<1x8x4xf32> to vector<8x4xf32>
    %3 = vector.extract_strided_slice %0 {offsets = [1, 0, 0], sizes = [1, 8, 4], strides = [1, 1, 1]} : vector<2x8x4xf32> to vector<1x8x4xf32>
    %4 = vector.shape_cast %3 : vector<1x8x4xf32> to vector<8x4xf32>
    %5 = tpu.concatenate %2, %4 in 1 : vector<8x4xf32>, vector<8x4xf32> -> vector<8x8xf32>
    %cst = arith.constant 0.000000e+00 : f32
    %6 = vector.broadcast %cst : f32 to vector<8x8xf32>
    %c0_2 = arith.constant 0 : index
    %c0_3 = arith.constant 0 : index
    %7 = vector.load %arg1[%c0_2, %c0_3] : memref<320x32xf32, #tpu.memory_space<vmem>>, vector<32x8xf32>
    %c32 = arith.constant 32 : index
    %c0_4 = arith.constant 0 : index
    %8 = vector.load %arg1[%c32, %c0_4] : memref<320x32xf32, #tpu.memory_space<vmem>>, vector<32x1xf32>
    %cst_5 = arith.constant dense<0.000000e+00> : vector<32x8xf32>
    %9 = tpu.matmul %7, %5, %cst_5 {dimension_numbers = #tpu.dot_dimension_numbers<[1], [0], [0], [1], [0, 0, 1, 1], [], []>} : vector<32x8xf32>, vector<8x8xf32>, vector<32x8xf32> -> vector<32x8xf32>
    %10 = vector.broadcast %8 : vector<32x1xf32> to vector<32x8xf32>
    %11 = arith.addf %9, %10 : vector<32x8xf32>
    %cst_6 = arith.constant 0.000000e+00 : f32
    %12 = vector.broadcast %cst_6 : f32 to vector<32x8xf32>
    %13 = arith.maximumf %11, %12 : vector<32x8xf32>
    %c64 = arith.constant 64 : index
    %c0_7 = arith.constant 0 : index
    %14 = vector.load %arg1[%c64, %c0_7] : memref<320x32xf32, #tpu.memory_space<vmem>>, vector<32x32xf32>
    %c96 = arith.constant 96 : index
    %c0_8 = arith.constant 0 : index
    %15 = vector.load %arg1[%c96, %c0_8] : memref<320x32xf32, #tpu.memory_space<vmem>>, vector<32x1xf32>
    %cst_9 = arith.constant dense<0.000000e+00> : vector<32x8xf32>
    %16 = tpu.matmul %14, %13, %cst_9 {dimension_numbers = #tpu.dot_dimension_numbers<[1], [0], [0], [1], [0, 0, 1, 1], [], []>} : vector<32x32xf32>, vector<32x8xf32>, vector<32x8xf32> -> vector<32x8xf32>
    %17 = vector.broadcast %15 : vector<32x1xf32> to vector<32x8xf32>
    %18 = arith.addf %16, %17 : vector<32x8xf32>
    %cst_10 = arith.constant 0.000000e+00 : f32
    %19 = vector.broadcast %cst_10 : f32 to vector<32x8xf32>
    %20 = arith.maximumf %18, %19 : vector<32x8xf32>
    %c128 = arith.constant 128 : index
    %c0_11 = arith.constant 0 : index
    %21 = vector.load %arg1[%c128, %c0_11] : memref<320x32xf32, #tpu.memory_space<vmem>>, vector<16x32xf32>
    %c144 = arith.constant 144 : index
    %c0_12 = arith.constant 0 : index
    %22 = vector.load %arg1[%c144, %c0_12] : memref<320x32xf32, #tpu.memory_space<vmem>>, vector<16x1xf32>
    %cst_13 = arith.constant dense<0.000000e+00> : vector<16x8xf32>
    %23 = tpu.matmul %21, %20, %cst_13 {dimension_numbers = #tpu.dot_dimension_numbers<[1], [0], [0], [1], [0, 0, 1, 1], [], []>} : vector<16x32xf32>, vector<32x8xf32>, vector<16x8xf32> -> vector<16x8xf32>
    %24 = vector.broadcast %22 : vector<16x1xf32> to vector<16x8xf32>
    %25 = arith.addf %23, %24 : vector<16x8xf32>
    %26 = vector.extract_strided_slice %25 {offsets = [0, 0], sizes = [8, 8], strides = [1, 1]} : vector<16x8xf32> to vector<8x8xf32>
    %27 = arith.subf %5, %26 : vector<8x8xf32>
    %28 = vector.extract_strided_slice %25 {offsets = [8, 0], sizes = [8, 8], strides = [1, 1]} : vector<16x8xf32> to vector<8x8xf32>
    %29 = arith.addf %6, %28 : vector<8x8xf32>
    %c160 = arith.constant 160 : index
    %c0_14 = arith.constant 0 : index
    %30 = vector.load %arg1[%c160, %c0_14] : memref<320x32xf32, #tpu.memory_space<vmem>>, vector<32x8xf32>
    %c192 = arith.constant 192 : index
    %c0_15 = arith.constant 0 : index
    %31 = vector.load %arg1[%c192, %c0_15] : memref<320x32xf32, #tpu.memory_space<vmem>>, vector<32x1xf32>
    %cst_16 = arith.constant dense<0.000000e+00> : vector<32x8xf32>
    %32 = tpu.matmul %30, %27, %cst_16 {dimension_numbers = #tpu.dot_dimension_numbers<[1], [0], [0], [1], [0, 0, 1, 1], [], []>} : vector<32x8xf32>, vector<8x8xf32>, vector<32x8xf32> -> vector<32x8xf32>
    %33 = vector.broadcast %31 : vector<32x1xf32> to vector<32x8xf32>
    %34 = arith.addf %32, %33 : vector<32x8xf32>
    %cst_17 = arith.constant 0.000000e+00 : f32
    %35 = vector.broadcast %cst_17 : f32 to vector<32x8xf32>
    %36 = arith.maximumf %34, %35 : vector<32x8xf32>
    %c224 = arith.constant 224 : index
    %c0_18 = arith.constant 0 : index
    %37 = vector.load %arg1[%c224, %c0_18] : memref<320x32xf32, #tpu.memory_space<vmem>>, vector<32x32xf32>
    %c256 = arith.constant 256 : index
    %c0_19 = arith.constant 0 : index
    %38 = vector.load %arg1[%c256, %c0_19] : memref<320x32xf32, #tpu.memory_space<vmem>>, vector<32x1xf32>
    %cst_20 = arith.constant dense<0.000000e+00> : vector<32x8xf32>
    %39 = tpu.matmul %37, %36, %cst_20 {dimension_numbers = #tpu.dot_dimension_numbers<[1], [0], [0], [1], [0, 0, 1, 1], [], []>} : vector<32x32xf32>, vector<32x8xf32>, vector<32x8xf32> -> vector<32x8xf32>
    %40 = vector.broadcast %38 : vector<32x1xf32> to vector<32x8xf32>
    %41 = arith.addf %39, %40 : vector<32x8xf32>
    %cst_21 = arith.constant 0.000000e+00 : f32
    %42 = vector.broadcast %cst_21 : f32 to vector<32x8xf32>
    %43 = arith.maximumf %41, %42 : vector<32x8xf32>
    %c296 = arith.constant 296 : index
    %c0_22 = arith.constant 0 : index
    %44 = vector.load %arg1[%c296, %c0_22] : memref<320x32xf32, #tpu.memory_space<vmem>>, vector<8x32xf32>
    %c312 = arith.constant 312 : index
    %c0_23 = arith.constant 0 : index
    %45 = vector.load %arg1[%c312, %c0_23] : memref<320x32xf32, #tpu.memory_space<vmem>>, vector<8x1xf32>
    %cst_24 = arith.constant dense<0.000000e+00> : vector<8x8xf32>
    %46 = tpu.matmul %44, %43, %cst_24 {dimension_numbers = #tpu.dot_dimension_numbers<[1], [0], [0], [1], [0, 0, 1, 1], [], []>} : vector<8x32xf32>, vector<32x8xf32>, vector<8x8xf32> -> vector<8x8xf32>
    %47 = arith.addf %29, %46 : vector<8x8xf32>
    %48 = vector.broadcast %45 : vector<8x1xf32> to vector<8x8xf32>
    %49 = arith.addf %47, %48 : vector<8x8xf32>
    %50 = vector.extract_strided_slice %49 {offsets = [0, 0], sizes = [8, 4], strides = [1, 1]} : vector<8x8xf32> to vector<8x4xf32>
    %c0_25 = arith.constant 0 : index
    %c0_26 = arith.constant 0 : index
    %c0_27 = arith.constant 0 : index
    %51 = vector.load %arg2[%c0_25, %c0_26, %c0_27] : memref<2x8x4xf32, #tpu.memory_space<vmem>>, vector<1x8x4xf32>
    %52 = vector.shape_cast %51 : vector<1x8x4xf32> to vector<8x4xf32>
    %53 = vector.shape_cast %50 : vector<8x4xf32> to vector<1x8x4xf32>
    tpu.vector_store %arg2[%c0_25, %c0_26, %c0_27], %53 {strides = array<i32>} : memref<2x8x4xf32, #tpu.memory_space<vmem>>, vector<1x8x4xf32>,
    %54 = vector.extract_strided_slice %49 {offsets = [0, 4], sizes = [8, 4], strides = [1, 1]} : vector<8x8xf32> to vector<8x4xf32>
    %c1 = arith.constant 1 : index
    %c0_28 = arith.constant 0 : index
    %c0_29 = arith.constant 0 : index
    %55 = vector.load %arg2[%c1, %c0_28, %c0_29] : memref<2x8x4xf32, #tpu.memory_space<vmem>>, vector<1x8x4xf32>
    %56 = vector.shape_cast %55 : vector<1x8x4xf32> to vector<8x4xf32>
    %57 = vector.shape_cast %54 : vector<8x4xf32> to vector<1x8x4xf32>
    tpu.vector_store %arg2[%c1, %c0_28, %c0_29], %57 {strides = array<i32>} : memref<2x8x4xf32, #tpu.memory_space<vmem>>, vector<1x8x4xf32>,
    return
  }
}

</mosaic_0001>

<llo_original>
// kernel: nbeats_forward.1
$region0: #{nbeats_forward.1}
  #allocation0 [shape = 'u32[]', space=smem, size = 0x4, offset = 0x4, fixed_abs, tag = 'smem constant byte address 0x4 - core index']
  #allocation1 [shape = 'u32[72,128]{1,0:T(1,128)}', space=vmem, size = 0x9000, scoped, tag = 'internal scratch']
  %s0 = inlined_call_operand.vmem [shape: f32[2,8,4], index: 0, kind: input, shape index: {}]
  %s1 = inlined_call_operand.vmem [shape: f32[320,32], index: 1, kind: input, shape index: {}]
  %s2 = inlined_call_operand.vmem [shape: f32[2,8,4], index: 2, kind: output, shape index: {}]
  %s3 = sld [smem:[#allocation0]]
  $region18: #{nbeats_forward.1} parent=0
    _
  %s5 = ssub.s32 1, %s3
  %s6 = scalar_select 0, %s5, %s3
  // Predicated region
  $region2: #{nbeats_forward.1} parent=0 // pred_check
    _
  $region3: #{nbeats_forward.1} parent=0 // pred_check_branch
    %8 = sbr.rel (0) target = $region5
  $region4: #{nbeats_forward.1} parent=0 // pred_region
    _
  $region5: #{nbeats_forward.1} parent=0 // pred_fallthru
    _
  // Predicated region
  $region6: #{nbeats_forward.1} parent=0 // pred_check
    _
  $region7: #{nbeats_forward.1} parent=0 // pred_check_branch
    %10 = sbr.rel (0) target = $region9
  $region8: #{nbeats_forward.1} parent=0 // pred_region
    _
  $region9: #{nbeats_forward.1} parent=0 // pred_fallthru
    _
  %v11 = vld [vmem:[%s0] sm:$0xff]
  %v12 = vld [vmem:[%s0 + $0x8] sm:$0xff]
  %14 = vrot.lane.b32.xlu0 %v12, 4
  %v15 = vpop.permute.xlu0 %14
  %vm17 = vcmask 31744
  %v18 = vsel %vm17, %v11, %v15
  %v19 = vld [vmem:[%s1] sm:$0xff]
  %v20 = vld [vmem:[%s1 + $0x8] sm:$0xff]
  %v21 = vld [vmem:[%s1 + $0x10] sm:$0xff]
  %v22 = vld [vmem:[%s1 + $0x18] sm:$0xff]
  %v23 = vld [vmem:[%s1 + $0x20] sm:$0xff]
  %v24 = vld [vmem:[%s1 + $0x28] sm:$0xff]
  %v25 = vld [vmem:[%s1 + $0x30] sm:$0xff]
  %v26 = vld [vmem:[%s1 + $0x38] sm:$0xff]
  %28 = vset.pattern.permute.xlu0 0
  %29 = vperm.xlu0 %28, %v23
  %v30 = vpop.permute.xlu0 %29
  %33 = vset.pattern.permute.xlu0 0
  %34 = vperm.xlu0 %33, %v24
  %v35 = vpop.permute.xlu0 %34
  %38 = vset.pattern.permute.xlu0 0
  %39 = vperm.xlu0 %38, %v25
  %v40 = vpop.permute.xlu0 %39
  %43 = vset.pattern.permute.xlu0 0
  %44 = vperm.xlu0 %43, %v26
  %v45 = vpop.permute.xlu0 %44
  %vm47 = vcmask 64512
  %v49 = vsel %vm47, %v19, 0
  %v52 = vsel %vm47, %v20, 0
  %v55 = vsel %vm47, %v21, 0
  %v58 = vsel %vm47, %v22, 0
  %60 = vmatpush.msra.mxu0 0.0
  %61 = vmatpush.msra.mxu0 0.0
  %62 = vmatpush.msra.mxu0 0.0
  %63 = vmatpush.msra.mxu0 0.0
  %64 = vmatpush.msra.mxu0 0.0
  %65 = vmatpush.msra.mxu0 0.0
  %66 = vmatpush.msra.mxu0 0.0
  %67 = vmatpush.msra.mxu0 0.0
  %68 = vmatpush.msra.mxu0 0.0
  %69 = vmatpush.msra.mxu0 0.0
  %70 = vmatpush.msra.mxu0 0.0
  %71 = vmatpush.msra.mxu0 0.0
  %72 = vmatpush.msra.mxu0 0.0
  %73 = vmatpush.msra.mxu0 0.0
  %74 = vmatpush.msra.mxu0 0.0
  %75 = vmatpush.msra.mxu0 %v18
  %76 = vmatmul.f32.gmra.mxu0 %v49
  %v77 = vpop.f32.mrf.mxu0
  %v78 = vadd.f32 %v30, %v77
  %79 = vmatmul.f32.gmra.mxu0 %v52
  %v80 = vpop.f32.mrf.mxu0
  %v81 = vadd.f32 %v35, %v80
  %82 = vmatmul.f32.gmra.mxu0 %v55
  %v83 = vpop.f32.mrf.mxu0
  %v84 = vadd.f32 %v40, %v83
  %85 = vmatmul.f32.gmra.mxu0 %v58
  %v86 = vpop.f32.mrf.mxu0
  %v87 = vadd.f32 %v45, %v86
  %88 = vdwg.mxu0
  %v89 = vmax.f32 %v78, 0.0
  %v90 = vmax.f32 %v81, 0.0
  %v91 = vmax.f32 %v84, 0.0
  %v92 = vmax.f32 %v87, 0.0
  %v93 = vld [vmem:[%s1 + $0x40] sm:$0xff]
  %v94 = vld [vmem:[%s1 + $0x48] sm:$0xff]
  %v95 = vld [vmem:[%s1 + $0x50] sm:$0xff]
  %v96 = vld [vmem:[%s1 + $0x58] sm:$0xff]
  %v97 = vld [vmem:[%s1 + $0x60] sm:$0xff]
  %v98 = vld [vmem:[%s1 + $0x68] sm:$0xff]
  %v99 = vld [vmem:[%s1 + $0x70] sm:$0xff]
  %v100 = vld [vmem:[%s1 + $0x78] sm:$0xff]
  %102 = vset.pattern.permute.xlu0 0
  %103 = vperm.xlu0 %102, %v97
  %v104 = vpop.permute.xlu0 %103
  %107 = vset.pattern.permute.xlu0 0
  %108 = vperm.xlu0 %107, %v98
  %v109 = vpop.permute.xlu0 %108
  %112 = vset.pattern.permute.xlu0 0
  %113 = vperm.xlu0 %112, %v99
  %v114 = vpop.permute.xlu0 %113
  %117 = vset.pattern.permute.xlu0 0
  %118 = vperm.xlu0 %117, %v100
  %v119 = vpop.permute.xlu0 %118
  %vm121 = vcmask 261120
  %v123 = vsel %vm121, %v93, 0
  %v126 = vsel %vm121, %v94, 0
  %v129 = vsel %vm121, %v95, 0
  %v132 = vsel %vm121, %v96, 0
  %134 = vmatpush.msra.mxu0 0.0
  %135 = vmatpush.msra.mxu0 0.0
  %136 = vmatpush.msra.mxu0 0.0
  %137 = vmatpush.msra.mxu0 0.0
  %138 = vmatpush.msra.mxu0 0.0
  %139 = vmatpush.msra.mxu0 0.0
  %140 = vmatpush.msra.mxu0 0.0
  %141 = vmatpush.msra.mxu0 0.0
  %142 = vmatpush.msra.mxu0 0.0
  %143 = vmatpush.msra.mxu0 0.0
  %144 = vmatpush.msra.mxu0 0.0
  %145 = vmatpush.msra.mxu0 0.0
  %146 = vmatpush.msra.mxu0 %v92
  %147 = vmatpush.msra.mxu0 %v91
  %148 = vmatpush.msra.mxu0 %v90
  %149 = vmatpush.msra.mxu0 %v89
  %150 = vmatmul.f32.gmra.mxu0 %v123
  %v151 = vpop.f32.mrf.mxu0
  %v152 = vadd.f32 %v104, %v151
  %153 = vmatmul.f32.gmra.mxu0 %v126
  %v154 = vpop.f32.mrf.mxu0
  %v155 = vadd.f32 %v109, %v154
  %156 = vmatmul.f32.gmra.mxu0 %v129
  %v157 = vpop.f32.mrf.mxu0
  %v158 = vadd.f32 %v114, %v157
  %159 = vmatmul.f32.gmra.mxu0 %v132
  %v160 = vpop.f32.mrf.mxu0
  %v161 = vadd.f32 %v119, %v160
  %162 = vdwg.mxu0
  %v163 = vmax.f32 %v152, 0.0
  %v164 = vmax.f32 %v155, 0.0
  %v165 = vmax.f32 %v158, 0.0
  %v166 = vmax.f32 %v161, 0.0
  %v167 = vld [vmem:[%s1 + $0x80] sm:$0xff]
  %v168 = vld [vmem:[%s1 + $0x88] sm:$0xff]
  %v169 = vld [vmem:[%s1 + $0x90] sm:$0xff]
  %v170 = vld [vmem:[%s1 + $0x98] sm:$0xff]
  %172 = vset.pattern.permute.xlu0 0
  %173 = vperm.xlu0 %172, %v169
  %v174 = vpop.permute.xlu0 %173
  %177 = vset.pattern.permute.xlu0 0
  %178 = vperm.xlu0 %177, %v170
  %v179 = vpop.permute.xlu0 %178
  %v182 = vsel %vm121, %v167, 0
  %v185 = vsel %vm121, %v168, 0
  %187 = vmatpush.msra.mxu0 0.0
  %188 = vmatpush.msra.mxu0 0.0
  %189 = vmatpush.msra.mxu0 0.0
  %190 = vmatpush.msra.mxu0 0.0
  %191 = vmatpush.msra.mxu0 0.0
  %192 = vmatpush.msra.mxu0 0.0
  %193 = vmatpush.msra.mxu0 0.0
  %194 = vmatpush.msra.mxu0 0.0
  %195 = vmatpush.msra.mxu0 0.0
  %196 = vmatpush.msra.mxu0 0.0
  %197 = vmatpush.msra.mxu0 0.0
  %198 = vmatpush.msra.mxu0 0.0
  %199 = vmatpush.msra.mxu0 %v166
  %200 = vmatpush.msra.mxu0 %v165
  %201 = vmatpush.msra.mxu0 %v164
  %202 = vmatpush.msra.mxu0 %v163
  %203 = vmatmul.f32.gmra.mxu0 %v182
  %v204 = vpop.f32.mrf.mxu0
  %v205 = vadd.f32 %v174, %v204
  %206 = vmatmul.f32.gmra.mxu0 %v185
  %v207 = vpop.f32.mrf.mxu0
  %v208 = vadd.f32 %v179, %v207
  %209 = vdwg.mxu0
  %v210 = vsub.f32 %v18, %v205
  %v211 = vadd.f32 %v208, 0.0
  %v212 = vld [vmem:[%s1 + $0xa0] sm:$0xff]
  %v213 = vld [vmem:[%s1 + $0xa8] sm:$0xff]
  %v214 = vld [vmem:[%s1 + $0xb0] sm:$0xff]
  %v215 = vld [vmem:[%s1 + $0xb8] sm:$0xff]
  %v216 = vld [vmem:[%s1 + $0xc0] sm:$0xff]
  %v217 = vld [vmem:[%s1 + $0xc8] sm:$0xff]
  %v218 = vld [vmem:[%s1 + $0xd0] sm:$0xff]
  %v219 = vld [vmem:[%s1 + $0xd8] sm:$0xff]
  %221 = vset.pattern.permute.xlu0 0
  %222 = vperm.xlu0 %221, %v216
  %v223 = vpop.permute.xlu0 %222
  %226 = vset.pattern.permute.xlu0 0
  %227 = vperm.xlu0 %226, %v217
  %v228 = vpop.permute.xlu0 %227
  %231 = vset.pattern.permute.xlu0 0
  %232 = vperm.xlu0 %231, %v218
  %v233 = vpop.permute.xlu0 %232
  %236 = vset.pattern.permute.xlu0 0
  %237 = vperm.xlu0 %236, %v219
  %v238 = vpop.permute.xlu0 %237
  %v241 = vsel %vm47, %v212, 0
  %v244 = vsel %vm47, %v213, 0
  %v247 = vsel %vm47, %v214, 0
  %v250 = vsel %vm47, %v215, 0
  %252 = vmatpush.msra.mxu0 0.0
  %253 = vmatpush.msra.mxu0 0.0
  %254 = vmatpush.msra.mxu0 0.0
  %255 = vmatpush.msra.mxu0 0.0
  %256 = vmatpush.msra.mxu0 0.0
  %257 = vmatpush.msra.mxu0 0.0
  %258 = vmatpush.msra.mxu0 0.0
  %259 = vmatpush.msra.mxu0 0.0
  %260 = vmatpush.msra.mxu0 0.0
  %261 = vmatpush.msra.mxu0 0.0
  %262 = vmatpush.msra.mxu0 0.0
  %263 = vmatpush.msra.mxu0 0.0
  %264 = vmatpush.msra.mxu0 0.0
  %265 = vmatpush.msra.mxu0 0.0
  %266 = vmatpush.msra.mxu0 0.0
  %267 = vmatpush.msra.mxu0 %v210
  %268 = vmatmul.f32.gmra.mxu0 %v241
  %v269 = vpop.f32.mrf.mxu0
  %v270 = vadd.f32 %v223, %v269
  %271 = vmatmul.f32.gmra.mxu0 %v244
  %v272 = vpop.f32.mrf.mxu0
  %v273 = vadd.f32 %v228, %v272
  %274 = vmatmul.f32.gmra.mxu0 %v247
  %v275 = vpop.f32.mrf.mxu0
  %v276 = vadd.f32 %v233, %v275
  %277 = vmatmul.f32.gmra.mxu0 %v250
  %v278 = vpop.f32.mrf.mxu0
  %v279 = vadd.f32 %v238, %v278
  %280 = vdwg.mxu0
  %v281 = vmax.f32 %v270, 0.0
  %v282 = vmax.f32 %v273, 0.0
  %v283 = vmax.f32 %v276, 0.0
  %v284 = vmax.f32 %v279, 0.0
  %v285 = vld [vmem:[%s1 + $0xe0] sm:$0xff]
  %v286 = vld [vmem:[%s1 + $0xe8] sm:$0xff]
  %v287 = vld [vmem:[%s1 + $0xf0] sm:$0xff]
  %v288 = vld [vmem:[%s1 + $0xf8] sm:$0xff]
  %v289 = vld [vmem:[%s1 + $0x100] sm:$0xff]
  %v290 = vld [vmem:[%s1 + $0x108] sm:$0xff]
  %v291 = vld [vmem:[%s1 + $0x110] sm:$0xff]
  %v292 = vld [vmem:[%s1 + $0x118] sm:$0xff]
  %294 = vset.pattern.permute.xlu0 0
  %295 = vperm.xlu0 %294, %v289
  %v296 = vpop.permute.xlu0 %295
  %299 = vset.pattern.permute.xlu0 0
  %300 = vperm.xlu0 %299, %v290
  %v301 = vpop.permute.xlu0 %300
  %304 = vset.pattern.permute.xlu0 0
  %305 = vperm.xlu0 %304, %v291
  %v306 = vpop.permute.xlu0 %305
  %309 = vset.pattern.permute.xlu0 0
  %310 = vperm.xlu0 %309, %v292
  %v311 = vpop.permute.xlu0 %310
  %v314 = vsel %vm121, %v285, 0
  %v317 = vsel %vm121, %v286, 0
  %v320 = vsel %vm121, %v287, 0
  %v323 = vsel %vm121, %v288, 0
  %325 = vmatpush.msra.mxu0 0.0
  %326 = vmatpush.msra.mxu0 0.0
  %327 = vmatpush.msra.mxu0 0.0
  %328 = vmatpush.msra.mxu0 0.0
  %329 = vmatpush.msra.mxu0 0.0
  %330 = vmatpush.msra.mxu0 0.0
  %331 = vmatpush.msra.mxu0 0.0
  %332 = vmatpush.msra.mxu0 0.0
  %333 = vmatpush.msra.mxu0 0.0
  %334 = vmatpush.msra.mxu0 0.0
  %335 = vmatpush.msra.mxu0 0.0
  %336 = vmatpush.msra.mxu0 0.0
  %337 = vmatpush.msra.mxu0 %v284
  %338 = vmatpush.msra.mxu0 %v283
  %339 = vmatpush.msra.mxu0 %v282
  %340 = vmatpush.msra.mxu0 %v281
  %341 = vmatmul.f32.gmra.mxu0 %v314
  %v342 = vpop.f32.mrf.mxu0
  %v343 = vadd.f32 %v296, %v342
  %344 = vmatmul.f32.gmra.mxu0 %v317
  %v345 = vpop.f32.mrf.mxu0
  %v346 = vadd.f32 %v301, %v345
  %347 = vmatmul.f32.gmra.mxu0 %v320
  %v348 = vpop.f32.mrf.mxu0
  %v349 = vadd.f32 %v306, %v348
  %350 = vmatmul.f32.gmra.mxu0 %v323
  %v351 = vpop.f32.mrf.mxu0
  %v352 = vadd.f32 %v311, %v351
  %353 = vdwg.mxu0
  %v354 = vmax.f32 %v343, 0.0
  %v355 = vmax.f32 %v346, 0.0
  %v356 = vmax.f32 %v349, 0.0
  %v357 = vmax.f32 %v352, 0.0
  %v358 = vld [vmem:[%s1 + $0x128] sm:$0xff]
  %v359 = vld [vmem:[%s1 + $0x138] sm:$0xff]
  %v361 = vsel %vm121, %v358, 0
  %363 = vmatpush.msra.mxu0 0.0
  %364 = vmatpush.msra.mxu0 0.0
  %365 = vmatpush.msra.mxu0 0.0
  %366 = vmatpush.msra.mxu0 0.0
  %367 = vmatpush.msra.mxu0 0.0
  %368 = vmatpush.msra.mxu0 0.0
  %369 = vmatpush.msra.mxu0 0.0
  %370 = vmatpush.msra.mxu0 0.0
  %371 = vmatpush.msra.mxu0 0.0
  %372 = vmatpush.msra.mxu0 0.0
  %373 = vmatpush.msra.mxu0 0.0
  %374 = vmatpush.msra.mxu0 0.0
  %375 = vmatpush.msra.mxu0 %v357
  %376 = vmatpush.msra.mxu0 %v356
  %377 = vmatpush.msra.mxu0 %v355
  %378 = vmatpush.msra.mxu0 %v354
  %379 = vmatmul.f32.gmra.mxu0 %v361
  %v380 = vpop.f32.mrf.mxu0
  %v381 = vadd.f32 0.0, %v380
  %382 = vdwg.mxu0
  %v383 = vadd.f32 %v211, %v381
  %385 = vset.pattern.permute.xlu0 0
  %386 = vperm.xlu0 %385, %v359
  %v387 = vpop.permute.xlu0 %386
  %v389 = vadd.f32 %v383, %v387
  %390 = vst.msk [vmem:[%s2] sm:$0xff] %vm17, %v389
  %392 = vrot.lane.b32.xlu0 %v389, 124
  %v393 = vpop.permute.xlu0 %392
  %s395 = scalar_lea.vmem %s2, 8
  %396 = vst.msk [vmem:[%s395] sm:$0xff] %vm17, %v393
  // Predicated region
  $region10: #{nbeats_forward.1} parent=0 // pred_check
    _
  $region11: #{nbeats_forward.1} parent=0 // pred_check_branch
    %398 = sbr.rel (0) target = $region13
  $region12: #{nbeats_forward.1} parent=0 // pred_region
    _
  $region13: #{nbeats_forward.1} parent=0 // pred_fallthru
    _
  // Predicated region
  $region14: #{nbeats_forward.1} parent=0 // pred_check
    _
  $region15: #{nbeats_forward.1} parent=0 // pred_check_branch
    %400 = sbr.rel (0) target = $region17
  $region16: #{nbeats_forward.1} parent=0 // pred_region
    _
  $region17: #{nbeats_forward.1} parent=0 // pred_fallthru
    _

</llo_original>
